<compile_context>
chip_gen: v7x
topology: tpu7x:2x2x1
jax: 0.10.0
libtpu: 0.0.40
codegen_flags: <defaults>
</compile_context>

<pallas_src>
import math
from functools import partial

import jax
import jax.numpy as jnp
from jax.experimental import pallas as pl
from jax.experimental.pallas import tpu as pltpu


# ----------------------------------------------------------------------------
# Buffer construction (deterministic, mirrors nn.Module.__init__)
# ----------------------------------------------------------------------------
def make_positional_encoding_table(d_model: int, max_len: int = 5000,
                                   dtype=jnp.float32) -> jnp.ndarray:
    """Builds the `pe` buffer as [max_len, d_model] (PyTorch stores [max_len,1,d_model])."""
    position = jnp.arange(max_len, dtype=jnp.float32)[:, None]            # [max_len, 1]
    div_term = jnp.exp(
        jnp.arange(0, d_model, 2, dtype=jnp.float32) * (-math.log(10000.0) / d_model)
    )                                                                      # [d_model//2]
    pe = jnp.zeros((max_len, d_model), dtype=jnp.float32)
    pe = pe.at[:, 0::2].set(jnp.sin(position * div_term))
    pe = pe.at[:, 1::2].set(jnp.cos(position * div_term))
    return pe.astype(dtype)


# ----------------------------------------------------------------------------
# Pallas kernels
# ----------------------------------------------------------------------------
def _add_bcast_kernel(x_ref, pe_ref, o_ref):
    # x: [TS, B, D], pe: [TS, D] -> broadcast-add over the batch (sublane) axis.
    pe_b = pe_ref[...][:, None, :]                     # hoisted, computed once
    o_ref[...] = (x_ref[...] + pe_b).astype(o_ref.dtype)


def _add_flat_kernel(x_ref, pe_ref, o_ref):
    # x, pe: [TS, B*D]  (pe pre-tiled in the wrapper -> lane-dense stores).
    o_ref[...] = (x_ref[...] + pe_ref[...]).astype(o_ref.dtype)


def _add_bcast_dropout_kernel(x_ref, pe_ref, m_ref, o_ref, *, scale):
    # m is a {0,1} keep mask in x.dtype; scale = 1/keep_prob (compile-time const).
    val = x_ref[...] + pe_ref[...][:, None, :]
    o_ref[...] = (val * m_ref[...] * scale).astype(o_ref.dtype)


def _add_flat_dropout_kernel(x_ref, pe_ref, m_ref, o_ref, *, scale):
    val = x_ref[...] + pe_ref[...]
    o_ref[...] = (val * m_ref[...] * scale).astype(o_ref.dtype)


# ----------------------------------------------------------------------------
# Wrapper
# ----------------------------------------------------------------------------
def _choose_seq_tile(seq_len: int, row_bytes: int,
                     target_bytes: int = 2 << 20) -> int:
    """Rows per tile: ~2 MiB per x tile, multiple of 8 sublanes (or the full S)."""
    ts = max(8, (target_bytes // max(row_bytes, 1)) // 8 * 8)
    return seq_len if ts >= seq_len else int(ts)


def positional_encoding_forward(x: jnp.ndarray, pe: jnp.ndarray,
                                *, dropout_p: float = 0.1,
                                training: bool = False,
                                seed: int = 0) -> jnp.ndarray:
    """Equivalent of PositionalEncoding.forward.

    x : [seq_len, batch, d_model]
    pe: [max_len, d_model]
    """
    S, B, D = x.shape
    pe_s = pe[:S].astype(x.dtype)          # cast up front: halves pe DMA for bf16 x

    # Lane-dense path when d_model is not a multiple of the 128-lane axis.
    use_flat = (D % 128) != 0

    row_bytes = B * D * jnp.dtype(x.dtype).itemsize
    TS = _choose_seq_tile(S, row_bytes)
    grid = (pl.cdiv(S, TS),)

    compiler_params = pltpu.CompilerParams(
        dimension_semantics=("parallel",),        # v7x: shard grid over both TCs
        vmem_limit_bytes=32 * 1024 * 1024,        # headroom on all generations
    )

    if use_flat:
        # Flatten so the output's last dim is B*D (lane-dense stores). pe is
        # replicated across batch in the wrapper; costs one extra x-sized read
        # but removes masked vst.msk partial stores for small d_model.
        x_in = x.reshape(S, B * D)
        pe_in = jnp.tile(pe_s, (1, B))            # [S, B*D]; pe_in[s, b*D+d] = pe_s[s, d]
        x_spec = pl.BlockSpec((TS, B * D), lambda i: (i, 0))
        pe_spec = pl.BlockSpec((TS, B * D), lambda i: (i, 0))
        out_spec = pl.BlockSpec((TS, B * D), lambda i: (i, 0))
        out_shape = jax.ShapeDtypeStruct((S, B * D), x.dtype)
        add_kernel, drop_kernel = _add_flat_kernel, _add_flat_dropout_kernel
    else:
        x_in = x
        pe_in = pe_s                              # [S, D]; tiny, broadcast in-kernel
        x_spec = pl.BlockSpec((TS, B, D), lambda i: (i, 0, 0))
        pe_spec = pl.BlockSpec((TS, D), lambda i: (i, 0))
        out_spec = pl.BlockSpec((TS, B, D), lambda i: (i, 0, 0))
        out_shape = jax.ShapeDtypeStruct((S, B, D), x.dtype)
        add_kernel, drop_kernel = _add_bcast_kernel, _add_bcast_dropout_kernel

    if (not training) or dropout_p == 0.0:
        # Eval mode: dropout is identity (matches model.eval() in PyTorch).
        out = pl.pallas_call(
            add_kernel,
            grid=grid,
            in_specs=[x_spec, pe_spec],
            out_specs=out_spec,
            out_shape=out_shape,
            compiler_params=compiler_params,
        )(x_in, pe_in)
    else:
        # Training mode: Bernoulli keep-mask generated on host (portable: works
        # on TPU and under interpret mode), fused mask-and-scale inside the
        # kernel.  Semantics match torch Dropout; the mask will not bit-match
        # torch's RNG stream (different randomness source).
        keep_prob = 1.0 - float(dropout_p)
        key = jax.random.PRNGKey(seed)
        keep_mask = jax.random.bernoulli(key, keep_prob,
                                         shape=x_in.shape).astype(x.dtype)
        out = pl.pallas_call(
            partial(drop_kernel, scale=1.0 / keep_prob),
            grid=grid,
            in_specs=[x_spec, pe_spec, x_spec],   # mask tiled exactly like x
            out_specs=out_spec,
            out_shape=out_shape,
            compiler_params=compiler_params,
        )(x_in, pe_in, keep_mask)

    return out.reshape(S, B, D) if use_flat else out


# ----------------------------------------------------------------------------
# Main
# ----------------------------------------------------------------------------
if __name__ == "__main__":
    d_model = 32
    seq_len = 8
    batch = 2
    max_len = 5000
    dropout_p = 0.1

    key = jax.random.PRNGKey(0)
    x = jax.random.normal(key, (seq_len, batch, d_model), dtype=jnp.float32)
    pe = make_positional_encoding_table(d_model, max_len=max_len)
    ref = x + pe[:seq_len][:, None, :]

    # --- Eval-mode forward (dropout = identity); exercises the flat (D<128) path.
    out = positional_encoding_forward(x, pe, dropout_p=dropout_p, training=False)
    out = jax.block_until_ready(out)
    assert out.shape == (seq_len, batch, d_model)
    assert out.dtype == x.dtype
    assert jnp.allclose(out, ref, atol=1e-6, rtol=1e-6), "eval mismatch vs reference"

    # --- Training-mode forward: every element is either 0 (dropped) or
    #     (x + pe)/keep_prob (kept) -- exact semantic check, RNG-agnostic.
    out_tr = positional_encoding_forward(x, pe, dropout_p=dropout_p,
                                         training=True, seed=1234)
    out_tr = jax.block_until_ready(out_tr)
    keep_prob = 1.0 - dropout_p
    scaled = ref / keep_prob
    is_dropped = jnp.abs(out_tr) < 1e-8
    is_kept = jnp.abs(out_tr - scaled) < 1e-5
    assert bool(jnp.all(is_dropped | is_kept)), "dropout output not {0, val/keep_prob}"

    # --- Second shape with d_model multiple of 128; exercises the 3-D broadcast path.
    d_model2, seq2, batch2 = 128, 16, 2
    x2 = jax.random.normal(jax.random.PRNGKey(1), (seq2, batch2, d_model2),
                           dtype=jnp.float32)
    pe2 = make_positional_encoding_table(d_model2, max_len=max_len)
    out2 = positional_encoding_forward(x2, pe2, dropout_p=dropout_p, training=False)
    out2 = jax.block_until_ready(out2)
    ref2 = x2 + pe2[:seq2][:, None, :]
    assert jnp.allclose(out2, ref2, atol=1e-6, rtol=1e-6), "3-D path mismatch"

    # --- Training-mode check on the 3-D broadcast path as well.
    out2_tr = positional_encoding_forward(x2, pe2, dropout_p=dropout_p,
                                          training=True, seed=7)
    out2_tr = jax.block_until_ready(out2_tr)
    scaled2 = ref2 / keep_prob
    ok2 = (jnp.abs(out2_tr) < 1e-8) | (jnp.abs(out2_tr - scaled2) < 1e-5)
    assert bool(jnp.all(ok2)), "3-D dropout output not {0, val/keep_prob}"

    print("KERNEL_OK")
</pallas_src>

<mosaic_0001>
module attributes {stable_mosaic.version = 11 : i64} {
  func.func @_add_flat_kernel(%arg0: i32, %arg1: memref<8x64xf32, #tpu.memory_space<vmem>>, %arg2: memref<8x64xf32, #tpu.memory_space<vmem>>, %arg3: memref<8x64xf32, #tpu.memory_space<vmem>>) attributes {dimension_semantics = [#tpu.dimension_semantics<parallel>], iteration_bounds = array<i64: 1>, scalar_prefetch = 0 : i64, scratch_operands = 0 : i64, tpu.core_type = #tpu.core_type<tc>, window_params = [{transform_indices = @transform_0, window_bounds = array<i64: 8, 64>}, {transform_indices = @transform_1, window_bounds = array<i64: 8, 64>}, {transform_indices = @transform_2, window_bounds = array<i64: 8, 64>}]} {
    %c0 = arith.constant 0 : index
    %c0_0 = arith.constant 0 : index
    %0 = vector.load %arg1[%c0, %c0_0] : memref<8x64xf32, #tpu.memory_space<vmem>>, vector<8x64xf32>
    %c0_1 = arith.constant 0 : index
    %c0_2 = arith.constant 0 : index
    %1 = vector.load %arg2[%c0_1, %c0_2] : memref<8x64xf32, #tpu.memory_space<vmem>>, vector<8x64xf32>
    %2 = arith.addf %0, %1 : vector<8x64xf32>
    %c0_3 = arith.constant 0 : index
    %c0_4 = arith.constant 0 : index
    %3 = vector.load %arg3[%c0_3, %c0_4] : memref<8x64xf32, #tpu.memory_space<vmem>>, vector<8x64xf32>
    tpu.vector_store %arg3[%c0_3, %c0_4], %2 {strides = array<i32>} : memref<8x64xf32, #tpu.memory_space<vmem>>, vector<8x64xf32>,
    return
  }
  func.func @transform_0(%arg0: i32) -> (i32, i32) {
    %c0_i32 = arith.constant 0 : i32
    %c0_i32_0 = arith.constant 0 : i32
    return %arg0, %c0_i32 : i32, i32
  }
  func.func @transform_1(%arg0: i32) -> (i32, i32) {
    %c0_i32 = arith.constant 0 : i32
    %c0_i32_0 = arith.constant 0 : i32
    return %arg0, %c0_i32 : i32, i32
  }
  func.func @transform_2(%arg0: i32) -> (i32, i32) {
    %c0_i32 = arith.constant 0 : i32
    %c0_i32_0 = arith.constant 0 : i32
    return %arg0, %c0_i32 : i32, i32
  }
}

</mosaic_0001>

<llo_original>
// kernel: tpu_custom_call.1
$region0: #{tpu_custom_call.1}
  #allocation0 [shape = 'u32[]', space=smem, size = 0x4, offset = 0x4, fixed_abs, tag = 'smem constant byte address 0x4 - core index']
  #allocation1 [shape = 'u32[144,128]{1,0:T(1,128)}', space=vmem, size = 0x12000, scoped, tag = 'internal scratch']
  %s0 = inlined_call_operand.hbm [shape: f32[8,64], index: 0, kind: input, shape index: {}]
  %s1 = inlined_call_operand.hbm [shape: f32[8,64], index: 1, kind: input, shape index: {}]
  %s2 = inlined_call_operand.hbm [shape: f32[8,64], index: 2, kind: output, shape index: {}]
  %s3 = sld [smem:[#allocation0]]
  $region26: #{tpu_custom_call.1} parent=0
    _
  %s5 = ssub.s32 1, %s3
  %s6 = scalar_select 0, %s5, %s3
  $region1: #{tpu_custom_call.1} parent=0
    #allocation2 [shape = 'u8[4096]{0}', space=vmem, size = 0x1000, scoped, tag = 'input window, operand 0, single buffered']
    #allocation3 [shape = 's32[1]{0}', space=sflag, size = 0x4, scoped, tag = 'scoped memory for tpu_custom_call.1']
    #allocation4 [shape = 's32[1]{0}', space=sflag, size = 0x4, scoped, tag = 'scoped memory for tpu_custom_call.1']
    #allocation5 [shape = 'u8[4096]{0}', space=vmem, size = 0x1000, scoped, tag = 'input window, operand 1, single buffered']
    #allocation6 [shape = 's32[1]{0}', space=sflag, size = 0x4, scoped, tag = 'scoped memory for tpu_custom_call.1']
    #allocation7 [shape = 'u8[4096]{0}', space=vmem, size = 0x1000, scoped, tag = 'output window, operand 0, single buffered']
    %7 = vsyncpa [#allocation3], 0
    %8 = vsyncpa [#allocation6], 0
    %9 = vsyncpa [#allocation4], 0
    // Predicated region
    $region2: #{tpu_custom_call.1} parent=1 // pred_check
      _
    $region3: #{tpu_custom_call.1} parent=1 // pred_check_branch
      %11 = sbr.rel (0) target = $region5
    $region4: #{tpu_custom_call.1} parent=1 // pred_region
      %s13 = ssub.s32 128, 128
      %14 = vsyncadd [#allocation3], %s13
      %s16 = sshll.u32 [#allocation2], 4
      %s17 = int_to_ptr.vmem [resolvable:$true] %s16
      %19 = dma.hbm_to_vmem [thread:$0]  %s0, 128, %s17, [#allocation3]
    $region5: #{tpu_custom_call.1} parent=1 // pred_fallthru
      _
    // Predicated region
    $region6: #{tpu_custom_call.1} parent=1 // pred_check
      _
    $region7: #{tpu_custom_call.1} parent=1 // pred_check_branch
      %21 = sbr.rel (0) target = $region9
    $region8: #{tpu_custom_call.1} parent=1 // pred_region
      %s23 = ssub.s32 128, 128
      %24 = vsyncadd [#allocation6], %s23
      %s26 = sshll.u32 [#allocation5], 4
      %s27 = int_to_ptr.vmem [resolvable:$true] %s26
      %29 = dma.hbm_to_vmem [thread:$0]  %s1, 128, %s27, [#allocation6]
    $region9: #{tpu_custom_call.1} parent=1 // pred_fallthru
      _
    // Predicated region
    $region10: #{tpu_custom_call.1} parent=1 // pred_check
      _
    $region11: #{tpu_custom_call.1} parent=1 // pred_check_branch
      %31 = sbr.rel (0) target = $region13
    $region12: #{tpu_custom_call.1} parent=1 // pred_region
      %32 = dma.done [#allocation3], 128
    $region13: #{tpu_custom_call.1} parent=1 // pred_fallthru
      _
    // Predicated region
    $region14: #{tpu_custom_call.1} parent=1 // pred_check
      _
    $region15: #{tpu_custom_call.1} parent=1 // pred_check_branch
      %34 = sbr.rel (0) target = $region17
    $region16: #{tpu_custom_call.1} parent=1 // pred_region
      %35 = dma.done [#allocation6], 128
    $region17: #{tpu_custom_call.1} parent=1 // pred_fallthru
      _
    %v36 = vld [vmem:[#allocation2] sm:$0xff]
    %v37 = vld [vmem:[#allocation5] sm:$0xff]
    %v38 = vadd.f32 %v36, %v37
    %vm39 = vcmask 523264
    %40 = vst.msk [vmem:[#allocation7] sm:$0xff] %vm39, %v38
    // Predicated region
    $region18: #{tpu_custom_call.1} parent=1 // pred_check
      _
    $region19: #{tpu_custom_call.1} parent=1 // pred_check_branch
      %42 = sbr.rel (0) target = $region21
    $region20: #{tpu_custom_call.1} parent=1 // pred_region
      %s44 = ssub.s32 128, 128
      %45 = vsyncadd [#allocation4], %s44
      %s47 = sshll.u32 [#allocation7], 4
      %s48 = int_to_ptr.vmem [resolvable:$true] %s47
      %50 = dma.vmem_to_hbm [thread:$0]  %s48, 128, %s2, [#allocation4]
    $region21: #{tpu_custom_call.1} parent=1 // pred_fallthru
      _
    // Predicated region
    $region22: #{tpu_custom_call.1} parent=1 // pred_check
      _
    $region23: #{tpu_custom_call.1} parent=1 // pred_check_branch
      %52 = sbr.rel (0) target = $region25
    $region24: #{tpu_custom_call.1} parent=1 // pred_region
      %53 = dma.done [#allocation4], 128
    $region25: #{tpu_custom_call.1} parent=1 // pred_fallthru
      _
    %54 = vsyncpa [#allocation3], 1
    %55 = vsyncpa [#allocation6], 1
    %56 = vsyncpa [#allocation4], 1

</llo_original>
